<compile_context>
chip_gen: v7x
topology: tpu7x:2x2x1
jax: 0.10.0
libtpu: 0.0.40
codegen_flags: <defaults>
</compile_context>

<pallas_src>
import functools

import jax
import jax.numpy as jnp
from jax.experimental import pallas as pl
from jax.experimental.pallas import tpu as pltpu


def _round_up(x, m):
    return ((x + m - 1) // m) * m


# --------------------------------------------------------------------------- #
# Kernel
# --------------------------------------------------------------------------- #
def _fused_kernel(x_ref,
                  w1_ref, b1_ref,
                  w2_ref, b2_ref,
                  w3_ref, b3_ref,
                  w4_ref, b4_ref,
                  o_ref):
    """3x (matmul + folded-BN bias + ReLU) + final linear; all heads fused."""
    y = x_ref[...]                                            # bf16 (tm, H)
    for w_ref, b_ref in ((w1_ref, b1_ref),
                         (w2_ref, b2_ref),
                         (w3_ref, b3_ref)):
        acc = jnp.dot(y, w_ref[...], preferred_element_type=jnp.float32)
        y = jnp.maximum(acc + b_ref[...], 0.0).astype(jnp.bfloat16)
    out = jnp.dot(y, w4_ref[...], preferred_element_type=jnp.float32)
    o_ref[...] = (out + b4_ref[...]).astype(o_ref.dtype)


def _run_fused(x2d, fused, *, tm):
    """x2d: (M_pad, H) bf16 channels-last.  Returns (M_pad, Cpad) f32."""
    M, H = x2d.shape
    w1, b1, w2, b2, w3, b3, w4, b4 = fused
    K = w2.shape[0]
    Cpad = w4.shape[1]

    full = lambda i: (0, 0)
    row = lambda i: (i, 0)

    return pl.pallas_call(
        _fused_kernel,
        out_shape=jax.ShapeDtypeStruct((M, Cpad), jnp.float32),
        grid_spec=pltpu.PrefetchScalarGridSpec(
            num_scalar_prefetch=0,
            grid=(M // tm,),
            in_specs=[
                pl.BlockSpec((tm, H), row),       # x (bf16)
                pl.BlockSpec((H, K), full),       # fused layer-1 weight (bf16)
                pl.BlockSpec((1, K), full),       # fused layer-1 shift  (f32)
                pl.BlockSpec((K, K), full),       # fused layer-2 weight
                pl.BlockSpec((1, K), full),
                pl.BlockSpec((K, K), full),       # fused layer-3 weight
                pl.BlockSpec((1, K), full),
                pl.BlockSpec((K, Cpad), full),    # fused final 1x1 conv weight
                pl.BlockSpec((1, Cpad), full),    # fused final bias (lane-padded)
            ],
            out_specs=pl.BlockSpec((tm, Cpad), row),
        ),
        compiler_params=pltpu.CompilerParams(
            dimension_semantics=("parallel",)),
    )(x2d, w1, b1, w2, b2, w3, b3, w4, b4)


# --------------------------------------------------------------------------- #
# Parameters (mirror MicroSegHead.__init__ / _init_weight) + fusion
# --------------------------------------------------------------------------- #
def make_params(key, classes, hidden_dim, dtype=jnp.float32):
    """Per-head raw parameters mirroring the PyTorch module.

    Conv weights: kaiming_normal_ (std = sqrt(2 / fan_in)); only the center tap
    of each 3x3 kernel contributes on a 1x1 input, so we keep W[:, :, 1, 1]
    transposed to (in, out).  BatchNorm: gamma=1, beta=0, running stats (0, 1).
    """
    heads = []
    for c in classes:
        layers = []
        for _ in range(3):
            key, k = jax.random.split(key)
            std = (2.0 / (hidden_dim * 3 * 3)) ** 0.5
            w_full = std * jax.random.normal(
                k, (hidden_dim, hidden_dim, 3, 3), dtype)
            w_center = w_full[:, :, 1, 1].T                    # (in, out)
            bn = (jnp.ones((hidden_dim,), dtype),              # gamma
                  jnp.zeros((hidden_dim,), dtype),             # beta
                  jnp.zeros((hidden_dim,), dtype),             # running_mean
                  jnp.ones((hidden_dim,), dtype))              # running_var
            layers.append((w_center, bn))
        key, kw, kb = jax.random.split(key, 3)
        std = (2.0 / hidden_dim) ** 0.5
        w4 = (std * jax.random.normal(kw, (c, hidden_dim), dtype)).T  # (in,out)
        bound = 1.0 / (hidden_dim ** 0.5)
        b4 = jax.random.uniform(kb, (c,), dtype, -bound, bound)
        heads.append((layers, w4, b4))
    return heads


def fuse_params(heads, classes, hidden_dim, *, eps=1e-5, lane_multiple=128,
                weight_dtype=jnp.bfloat16):
    """Fold eval-mode BatchNorm into the weights and fuse all heads into one
    block-diagonal MLP with a lane-dense (128-padded) concatenated class axis."""
    n = len(heads)
    H = hidden_dim
    K = n * H
    csum = sum(classes)
    cpad = _round_up(max(csum, 1), lane_multiple)

    w_cat = [jnp.zeros((H, K), jnp.float32),
             jnp.zeros((K, K), jnp.float32),
             jnp.zeros((K, K), jnp.float32)]
    b_cat = [jnp.zeros((1, K), jnp.float32) for _ in range(3)]
    w4_cat = jnp.zeros((K, cpad), jnp.float32)
    b4_cat = jnp.zeros((1, cpad), jnp.float32)

    col = 0
    for h, ((layers, w4, b4), c) in enumerate(zip(heads, classes)):
        r0 = h * H
        for l, (w, (gamma, beta, mean, var)) in enumerate(layers):
            scale = gamma / jnp.sqrt(var + eps)
            shift = beta - mean * scale
            w_scaled = w.astype(jnp.float32) * scale[None, :]  # fold BN scale
            if l == 0:
                w_cat[0] = w_cat[0].at[:, r0:r0 + H].set(w_scaled)
            else:
                w_cat[l] = w_cat[l].at[r0:r0 + H, r0:r0 + H].set(w_scaled)
            b_cat[l] = b_cat[l].at[0, r0:r0 + H].set(shift)
        w4_cat = w4_cat.at[r0:r0 + H, col:col + c].set(w4.astype(jnp.float32))
        b4_cat = b4_cat.at[0, col:col + c].set(b4.astype(jnp.float32))
        col += c

    return (w_cat[0].astype(weight_dtype), b_cat[0],
            w_cat[1].astype(weight_dtype), b_cat[1],
            w_cat[2].astype(weight_dtype), b_cat[2],
            w4_cat.astype(weight_dtype), b4_cat)


# --------------------------------------------------------------------------- #
# Forward wrapper
# --------------------------------------------------------------------------- #
@functools.partial(jax.jit, static_argnames=("n_classes", "tm_request"))
def micro_seg_head_forward(features, fused_params, *, n_classes, tm_request=512):
    """features: (B, N, hidden_dim)  ->  (B, N, n_classes)."""
    B, N, H = features.shape
    M = B * N
    x2d = features.reshape(M, H).astype(jnp.bfloat16)

    # Row tiling: big tiles amortize the ~0.35us grid-step overhead, tm must be
    # a multiple of 16 (bf16 sublane packing), and when there is enough work we
    # keep >= 2 tiles so v7x's two TensorCores both get a share of the
    # 'parallel' row axis.  Tail rows are zero-padded, never dropped.
    m16 = _round_up(M, 16)
    tm = max(16, min(_round_up(tm_request, 16), m16))
    if m16 // tm < 2 and m16 >= 512:
        tm = _round_up(-(-m16 // 2), 16)
    m_pad = _round_up(m16, tm)
    if m_pad != M:
        x2d = jnp.pad(x2d, ((0, m_pad - M), (0, 0)))

    out = _run_fused(x2d, fused_params, tm=tm)         # (m_pad, Cpad) f32
    return out[:M, :n_classes].reshape(B, N, n_classes)


# --------------------------------------------------------------------------- #
# Pure-JAX reference (eval-mode BatchNorm) for a correctness sanity check
# --------------------------------------------------------------------------- #
def _reference(features, heads, eps=1e-5):
    B, N, H = features.shape
    x = features.reshape(B * N, H).astype(jnp.float32)
    outs = []
    for layers, w4, b4 in heads:
        y = x
        for w, (gamma, beta, mean, var) in layers:
            y = y @ w.astype(jnp.float32)
            y = (y - mean) / jnp.sqrt(var + eps) * gamma + beta
            y = jnp.maximum(y, 0.0)
        outs.append(y @ w4.astype(jnp.float32) + b4)
    return jnp.concatenate(outs, axis=1).reshape(B, N, -1)


if __name__ == "__main__":
    B, N, hidden_dim = 2, 8, 32
    classes = (3, 5)
    n_classes = sum(classes)

    key = jax.random.PRNGKey(0)
    key, kx = jax.random.split(key)
    features = jax.random.normal(kx, (B, N, hidden_dim), jnp.float32)

    heads = make_params(key, classes, hidden_dim)
    fused = fuse_params(heads, classes, hidden_dim)

    out = micro_seg_head_forward(features, fused, n_classes=n_classes)
    out = jax.block_until_ready(out)

    assert out.shape == (B, N, n_classes), out.shape
    assert jnp.all(jnp.isfinite(out))

    ref = _reference(features, heads)
    assert jnp.allclose(out, ref, atol=5e-2, rtol=5e-2), (
        float(jnp.max(jnp.abs(out - ref))))

    print("KERNEL_OK")
</pallas_src>

<mosaic_0001>
module attributes {stable_mosaic.version = 11 : i64} {
  func.func @_fused_kernel(%arg0: i32, %arg1: memref<16x32xbf16, #tpu.memory_space<vmem>>, %arg2: memref<32x64xbf16, #tpu.memory_space<vmem>>, %arg3: memref<1x64xf32, #tpu.memory_space<vmem>>, %arg4: memref<64x64xbf16, #tpu.memory_space<vmem>>, %arg5: memref<1x64xf32, #tpu.memory_space<vmem>>, %arg6: memref<64x64xbf16, #tpu.memory_space<vmem>>, %arg7: memref<1x64xf32, #tpu.memory_space<vmem>>, %arg8: memref<64x128xbf16, #tpu.memory_space<vmem>>, %arg9: memref<1x128xf32, #tpu.memory_space<vmem>>, %arg10: memref<16x128xf32, #tpu.memory_space<vmem>>) attributes {dimension_semantics = [#tpu.dimension_semantics<parallel>], iteration_bounds = array<i64: 1>, scalar_prefetch = 0 : i64, scratch_operands = 0 : i64, tpu.core_type = #tpu.core_type<tc>, window_params = [{transform_indices = @transform_0, window_bounds = array<i64: 16, 32>}, {pipeline_mode = #tpu.pipeline_mode<synchronous>, transform_indices = @transform_1, window_bounds = array<i64: 32, 64>}, {pipeline_mode = #tpu.pipeline_mode<synchronous>, transform_indices = @transform_2, window_bounds = array<i64: 1, 64>}, {pipeline_mode = #tpu.pipeline_mode<synchronous>, transform_indices = @transform_3, window_bounds = array<i64: 64, 64>}, {pipeline_mode = #tpu.pipeline_mode<synchronous>, transform_indices = @transform_4, window_bounds = array<i64: 1, 64>}, {pipeline_mode = #tpu.pipeline_mode<synchronous>, transform_indices = @transform_5, window_bounds = array<i64: 64, 64>}, {pipeline_mode = #tpu.pipeline_mode<synchronous>, transform_indices = @transform_6, window_bounds = array<i64: 1, 64>}, {pipeline_mode = #tpu.pipeline_mode<synchronous>, transform_indices = @transform_7, window_bounds = array<i64: 64, 128>}, {pipeline_mode = #tpu.pipeline_mode<synchronous>, transform_indices = @transform_8, window_bounds = array<i64: 1, 128>}, {transform_indices = @transform_9, window_bounds = array<i64: 16, 128>}]} {
    %c0 = arith.constant 0 : index
    %c0_0 = arith.constant 0 : index
    %0 = vector.load %arg1[%c0, %c0_0] : memref<16x32xbf16, #tpu.memory_space<vmem>>, vector<16x32xbf16>
    %c0_1 = arith.constant 0 : index
    %c0_2 = arith.constant 0 : index
    %1 = vector.load %arg2[%c0_1, %c0_2] : memref<32x64xbf16, #tpu.memory_space<vmem>>, vector<32x64xbf16>
    %cst = arith.constant dense<0.000000e+00> : vector<16x64xf32>
    %2 = tpu.matmul %0, %1, %cst {dimension_numbers = #tpu.dot_dimension_numbers<[1], [0], [0], [1], [0, 0, 1, 1], [], []>} : vector<16x32xbf16>, vector<32x64xbf16>, vector<16x64xf32> -> vector<16x64xf32>
    %c0_3 = arith.constant 0 : index
    %c0_4 = arith.constant 0 : index
    %3 = vector.load %arg3[%c0_3, %c0_4] : memref<1x64xf32, #tpu.memory_space<vmem>>, vector<1x64xf32>
    %4 = vector.broadcast %3 : vector<1x64xf32> to vector<16x64xf32>
    %5 = arith.addf %2, %4 : vector<16x64xf32>
    %cst_5 = arith.constant 0.000000e+00 : f32
    %6 = vector.broadcast %cst_5 : f32 to vector<16x64xf32>
    %7 = arith.maximumf %5, %6 : vector<16x64xf32>
    %8 = arith.truncf %7 : vector<16x64xf32> to vector<16x64xbf16>
    %c0_6 = arith.constant 0 : index
    %c0_7 = arith.constant 0 : index
    %9 = vector.load %arg4[%c0_6, %c0_7] : memref<64x64xbf16, #tpu.memory_space<vmem>>, vector<64x64xbf16>
    %cst_8 = arith.constant dense<0.000000e+00> : vector<16x64xf32>
    %10 = tpu.matmul %8, %9, %cst_8 {dimension_numbers = #tpu.dot_dimension_numbers<[1], [0], [0], [1], [0, 0, 1, 1], [], []>} : vector<16x64xbf16>, vector<64x64xbf16>, vector<16x64xf32> -> vector<16x64xf32>
    %c0_9 = arith.constant 0 : index
    %c0_10 = arith.constant 0 : index
    %11 = vector.load %arg5[%c0_9, %c0_10] : memref<1x64xf32, #tpu.memory_space<vmem>>, vector<1x64xf32>
    %12 = vector.broadcast %11 : vector<1x64xf32> to vector<16x64xf32>
    %13 = arith.addf %10, %12 : vector<16x64xf32>
    %cst_11 = arith.constant 0.000000e+00 : f32
    %14 = vector.broadcast %cst_11 : f32 to vector<16x64xf32>
    %15 = arith.maximumf %13, %14 : vector<16x64xf32>
    %16 = arith.truncf %15 : vector<16x64xf32> to vector<16x64xbf16>
    %c0_12 = arith.constant 0 : index
    %c0_13 = arith.constant 0 : index
    %17 = vector.load %arg6[%c0_12, %c0_13] : memref<64x64xbf16, #tpu.memory_space<vmem>>, vector<64x64xbf16>
    %cst_14 = arith.constant dense<0.000000e+00> : vector<16x64xf32>
    %18 = tpu.matmul %16, %17, %cst_14 {dimension_numbers = #tpu.dot_dimension_numbers<[1], [0], [0], [1], [0, 0, 1, 1], [], []>} : vector<16x64xbf16>, vector<64x64xbf16>, vector<16x64xf32> -> vector<16x64xf32>
    %c0_15 = arith.constant 0 : index
    %c0_16 = arith.constant 0 : index
    %19 = vector.load %arg7[%c0_15, %c0_16] : memref<1x64xf32, #tpu.memory_space<vmem>>, vector<1x64xf32>
    %20 = vector.broadcast %19 : vector<1x64xf32> to vector<16x64xf32>
    %21 = arith.addf %18, %20 : vector<16x64xf32>
    %cst_17 = arith.constant 0.000000e+00 : f32
    %22 = vector.broadcast %cst_17 : f32 to vector<16x64xf32>
    %23 = arith.maximumf %21, %22 : vector<16x64xf32>
    %24 = arith.truncf %23 : vector<16x64xf32> to vector<16x64xbf16>
    %c0_18 = arith.constant 0 : index
    %c0_19 = arith.constant 0 : index
    %25 = vector.load %arg8[%c0_18, %c0_19] : memref<64x128xbf16, #tpu.memory_space<vmem>>, vector<64x128xbf16>
    %cst_20 = arith.constant dense<0.000000e+00> : vector<16x128xf32>
    %26 = tpu.matmul %24, %25, %cst_20 {dimension_numbers = #tpu.dot_dimension_numbers<[1], [0], [0], [1], [0, 0, 1, 1], [], []>} : vector<16x64xbf16>, vector<64x128xbf16>, vector<16x128xf32> -> vector<16x128xf32>
    %c0_21 = arith.constant 0 : index
    %c0_22 = arith.constant 0 : index
    %27 = vector.load %arg9[%c0_21, %c0_22] : memref<1x128xf32, #tpu.memory_space<vmem>>, vector<1x128xf32>
    %28 = vector.broadcast %27 : vector<1x128xf32> to vector<16x128xf32>
    %29 = arith.addf %26, %28 : vector<16x128xf32>
    %c0_23 = arith.constant 0 : index
    %c0_24 = arith.constant 0 : index
    %30 = vector.load %arg10[%c0_23, %c0_24] : memref<16x128xf32, #tpu.memory_space<vmem>>, vector<16x128xf32>
    tpu.vector_store %arg10[%c0_23, %c0_24], %29 {strides = array<i32>} : memref<16x128xf32, #tpu.memory_space<vmem>>, vector<16x128xf32>,
    return
  }
  func.func @transform_0(%arg0: i32) -> (i32, i32) {
    %c0_i32 = arith.constant 0 : i32
    %c0_i32_0 = arith.constant 0 : i32
    return %arg0, %c0_i32 : i32, i32
  }
  func.func @transform_1(%arg0: i32) -> (i32, i32) {
    %c0_i32 = arith.constant 0 : i32
    %c0_i32_0 = arith.constant 0 : i32
    %c0_i32_1 = arith.constant 0 : i32
    return %c0_i32, %c0_i32_0 : i32, i32
  }
  func.func @transform_2(%arg0: i32) -> (i32, i32) {
    %c0_i32 = arith.constant 0 : i32
    %c0_i32_0 = arith.constant 0 : i32
    %c0_i32_1 = arith.constant 0 : i32
    return %c0_i32, %c0_i32_0 : i32, i32
  }
  func.func @transform_3(%arg0: i32) -> (i32, i32) {
    %c0_i32 = arith.constant 0 : i32
    %c0_i32_0 = arith.constant 0 : i32
    %c0_i32_1 = arith.constant 0 : i32
    return %c0_i32, %c0_i32_0 : i32, i32
  }
  func.func @transform_4(%arg0: i32) -> (i32, i32) {
    %c0_i32 = arith.constant 0 : i32
    %c0_i32_0 = arith.constant 0 : i32
    %c0_i32_1 = arith.constant 0 : i32
    return %c0_i32, %c0_i32_0 : i32, i32
  }
  func.func @transform_5(%arg0: i32) -> (i32, i32) {
    %c0_i32 = arith.constant 0 : i32
    %c0_i32_0 = arith.constant 0 : i32
    %c0_i32_1 = arith.constant 0 : i32
    return %c0_i32, %c0_i32_0 : i32, i32
  }
  func.func @transform_6(%arg0: i32) -> (i32, i32) {
    %c0_i32 = arith.constant 0 : i32
    %c0_i32_0 = arith.constant 0 : i32
    %c0_i32_1 = arith.constant 0 : i32
    return %c0_i32, %c0_i32_0 : i32, i32
  }
  func.func @transform_7(%arg0: i32) -> (i32, i32) {
    %c0_i32 = arith.constant 0 : i32
    %c0_i32_0 = arith.constant 0 : i32
    %c0_i32_1 = arith.constant 0 : i32
    return %c0_i32, %c0_i32_0 : i32, i32
  }
  func.func @transform_8(%arg0: i32) -> (i32, i32) {
    %c0_i32 = arith.constant 0 : i32
    %c0_i32_0 = arith.constant 0 : i32
    %c0_i32_1 = arith.constant 0 : i32
    return %c0_i32, %c0_i32_0 : i32, i32
  }
  func.func @transform_9(%arg0: i32) -> (i32, i32) {
    %c0_i32 = arith.constant 0 : i32
    %c0_i32_0 = arith.constant 0 : i32
    return %arg0, %c0_i32 : i32, i32
  }
}

</mosaic_0001>

<llo_original>
// kernel: micro_seg_head_forward.1
$region0: #{micro_seg_head_forward.1}
  #allocation0 [shape = 'u32[]', space=smem, size = 0x4, offset = 0x4, fixed_abs, tag = 'smem constant byte address 0x4 - core index']
  #allocation1 [shape = 'u32[144,128]{1,0:T(1,128)}', space=vmem, size = 0x12000, scoped, tag = 'internal scratch']
  %s0 = inlined_call_operand.vmem [shape: bf16[16,32], index: 0, kind: input, shape index: {}]
  %s1 = inlined_call_operand.hbm [shape: bf16[32,64], index: 1, kind: input, shape index: {}]
  %s2 = inlined_call_operand.vmem [shape: f32[1,64], index: 2, kind: input, shape index: {}]
  %s3 = inlined_call_operand.vmem [shape: bf16[64,64], index: 3, kind: input, shape index: {}]
  %s4 = inlined_call_operand.vmem [shape: f32[1,64], index: 4, kind: input, shape index: {}]
  %s5 = inlined_call_operand.hbm [shape: bf16[64,64], index: 5, kind: input, shape index: {}]
  %s6 = inlined_call_operand.vmem [shape: f32[1,64], index: 6, kind: input, shape index: {}]
  %s7 = inlined_call_operand.hbm [shape: bf16[64,128], index: 7, kind: input, shape index: {}]
  %s8 = inlined_call_operand.vmem [shape: f32[1,128], index: 8, kind: input, shape index: {}]
  %s9 = inlined_call_operand.vmem [shape: f32[16,128], index: 9, kind: output, shape index: {}]
  %s10 = sld [smem:[#allocation0]]
  $region58: #{micro_seg_head_forward.1} parent=0
    _
  %s12 = ssub.s32 1, %s10
  %s13 = scalar_select 0, %s12, %s10
  $region1: #{micro_seg_head_forward.1} parent=0
    #allocation2 [shape = 'u8[8192]{0}', space=vmem, size = 0x2000, scoped, tag = 'input window, operand 1, single buffered']
    #allocation3 [shape = 's32[1]{0}', space=sflag, size = 0x4, scoped, tag = 'scoped memory for micro_seg_head_forward.1']
    #allocation4 [shape = 'u8[16384]{0}', space=vmem, size = 0x4000, scoped, tag = 'input window, operand 5, single buffered']
    #allocation5 [shape = 's32[1]{0}', space=sflag, size = 0x4, scoped, tag = 'scoped memory for micro_seg_head_forward.1']
    #allocation6 [shape = 'u8[16384]{0}', space=vmem, size = 0x4000, scoped, tag = 'input window, operand 7, single buffered']
    %14 = vsyncpa [#allocation3], 0
    %15 = vsyncpa [#allocation5], 0
    // Predicated region
    $region2: #{micro_seg_head_forward.1} parent=1 // pred_check
      _
    $region3: #{micro_seg_head_forward.1} parent=1 // pred_check_branch
      %17 = sbr.rel (0) target = $region5
    $region4: #{micro_seg_head_forward.1} parent=1 // pred_region
      _
    $region5: #{micro_seg_head_forward.1} parent=1 // pred_fallthru
      _
    // Predicated region
    $region6: #{micro_seg_head_forward.1} parent=1 // pred_check
      _
    $region7: #{micro_seg_head_forward.1} parent=1 // pred_check_branch
      %19 = sbr.rel (0) target = $region9
    $region8: #{micro_seg_head_forward.1} parent=1 // pred_region
      %s21 = ssub.s32 256, 256
      %22 = vsyncadd [#allocation3], %s21
      %s23 = sshll.u32 [#allocation2], 4
      %s24 = int_to_ptr.vmem [resolvable:$true] %s23
      %29 = dma.hbm_to_vmem [thread:$0]  %s1, 256, %s24, [#allocation3], 64, 64, 4
    $region9: #{micro_seg_head_forward.1} parent=1 // pred_fallthru
      _
    // Predicated region
    $region10: #{micro_seg_head_forward.1} parent=1 // pred_check
      _
    $region11: #{micro_seg_head_forward.1} parent=1 // pred_check_branch
      %31 = sbr.rel (0) target = $region13
    $region12: #{micro_seg_head_forward.1} parent=1 // pred_region
      _
    $region13: #{micro_seg_head_forward.1} parent=1 // pred_fallthru
      _
    // Predicated region
    $region14: #{micro_seg_head_forward.1} parent=1 // pred_check
      _
    $region15: #{micro_seg_head_forward.1} parent=1 // pred_check_branch
      %33 = sbr.rel (0) target = $region17
    $region16: #{micro_seg_head_forward.1} parent=1 // pred_region
      _
    $region17: #{micro_seg_head_forward.1} parent=1 // pred_fallthru
      _
    // Predicated region
    $region18: #{micro_seg_head_forward.1} parent=1 // pred_check
      _
    $region19: #{micro_seg_head_forward.1} parent=1 // pred_check_branch
      %35 = sbr.rel (0) target = $region21
    $region20: #{micro_seg_head_forward.1} parent=1 // pred_region
      _
    $region21: #{micro_seg_head_forward.1} parent=1 // pred_fallthru
      _
    // Predicated region
    $region22: #{micro_seg_head_forward.1} parent=1 // pred_check
      _
    $region23: #{micro_seg_head_forward.1} parent=1 // pred_check_branch
      %37 = sbr.rel (0) target = $region25
    $region24: #{micro_seg_head_forward.1} parent=1 // pred_region
      %s39 = ssub.s32 512, 512
      %40 = vsyncadd [#allocation5], %s39
      %s41 = sshll.u32 [#allocation4], 4
      %s42 = int_to_ptr.vmem [resolvable:$true] %s41
      %47 = dma.hbm_to_vmem [thread:$0]  %s5, 512, %s42, [#allocation5], 64, 64, 4
    $region25: #{micro_seg_head_forward.1} parent=1 // pred_fallthru
      _
    // Predicated region
    $region26: #{micro_seg_head_forward.1} parent=1 // pred_check
      _
    $region27: #{micro_seg_head_forward.1} parent=1 // pred_check_branch
      %49 = sbr.rel (0) target = $region29
    $region28: #{micro_seg_head_forward.1} parent=1 // pred_region
      _
    $region29: #{micro_seg_head_forward.1} parent=1 // pred_fallthru
      _
    // Predicated region
    $region30: #{micro_seg_head_forward.1} parent=1 // pred_check
      _
    $region31: #{micro_seg_head_forward.1} parent=1 // pred_check_branch
      %51 = sbr.rel (0) target = $region33
    $region32: #{micro_seg_head_forward.1} parent=1 // pred_region
      %s53 = ssub.s32 512, 512
      %54 = vsyncadd [#allocation5], %s53
      %s55 = sshll.u32 [#allocation6], 4
      %s56 = int_to_ptr.vmem [resolvable:$true] %s55
      %61 = dma.hbm_to_vmem [thread:$0]  %s7, 512, %s56, [#allocation5], 64, 64, 4
    $region33: #{micro_seg_head_forward.1} parent=1 // pred_fallthru
      _
    // Predicated region
    $region34: #{micro_seg_head_forward.1} parent=1 // pred_check
      _
    $region35: #{micro_seg_head_forward.1} parent=1 // pred_check_branch
      %63 = sbr.rel (0) target = $region37
    $region36: #{micro_seg_head_forward.1} parent=1 // pred_region
      _
    $region37: #{micro_seg_head_forward.1} parent=1 // pred_fallthru
      _
    // Predicated region
    $region38: #{micro_seg_head_forward.1} parent=1 // pred_check
      _
    $region39: #{micro_seg_head_forward.1} parent=1 // pred_check_branch
      %65 = sbr.rel (0) target = $region41
    $region40: #{micro_seg_head_forward.1} parent=1 // pred_region
      %66 = dma.done [#allocation3], 256
    $region41: #{micro_seg_head_forward.1} parent=1 // pred_fallthru
      _
    // Predicated region
    $region42: #{micro_seg_head_forward.1} parent=1 // pred_check
      _
    $region43: #{micro_seg_head_forward.1} parent=1 // pred_check_branch
      %68 = sbr.rel (0) target = $region45
    $region44: #{micro_seg_head_forward.1} parent=1 // pred_region
      %69 = dma.done [#allocation5], 512
    $region45: #{micro_seg_head_forward.1} parent=1 // pred_fallthru
      _
    // Predicated region
    $region46: #{micro_seg_head_forward.1} parent=1 // pred_check
      _
    $region47: #{micro_seg_head_forward.1} parent=1 // pred_check_branch
      %71 = sbr.rel (0) target = $region49
    $region48: #{micro_seg_head_forward.1} parent=1 // pred_region
      %72 = dma.done [#allocation5], 512
    $region49: #{micro_seg_head_forward.1} parent=1 // pred_fallthru
      _
    %v74 = vld [vmem:[%s0] sm:$0xf]
    %v75 = vld [vmem:[%s0 + $0x4] sm:$0xf]
    %v76 = vld [vmem:[#allocation2] sm:$0xf]
    %v77 = vld [vmem:[#allocation2 + $0x4] sm:$0xf]
    %v78 = vld [vmem:[#allocation2 + $0x8] sm:$0xf]
    %v79 = vld [vmem:[#allocation2 + $0xc] sm:$0xf]
    %v80 = vld [vmem:[%s2] sm:$0x1]
    %v82 = vlaneseq
    %v83 = vshrl.u32 %v82, 7
    %v84 = vsub.s32 0, %v83
    %v85 = vrot.slane %v80, %v84
    %v89 = vunpack.c.l.b16 %v74
    %v90 = vunpack.c.l.b16 %v75
    %v91 = vpack.c.b16 %v90, %v89
    %v96 = vunpack.c.l.b16 %v76
    %v97 = vunpack.c.l.b16 %v77
    %v98 = vunpack.c.l.b16 %v78
    %v99 = vunpack.c.l.b16 %v79
    %v100 = vpack.c.b16 %v97, %v96
    %v101 = vpack.c.b16 %v99, %v98
    %vm104 = vcmask 261120
    %v106 = vsel %vm104, %v91, 0
    %108 = vmatprep.subr.bf16.mxu0 0
    %109 = vmatpush1.bf16.msra.mxu0 %v100
    %110 = vmatprep.subr.bf16.mxu0 0
    %111 = vmatpush1.bf16.msra.mxu0 %v101
    %112 = vmatprep.subr.bf16.mxu0 0
    %113 = vmatpush1.bf16.msra.mxu0 0
    %114 = vmatprep.subr.bf16.mxu0 0
    %115 = vmatpush1.bf16.msra.mxu0 0
    %116 = vmatprep.subr.bf16.mxu0 0
    %117 = vmatpush1.bf16.msra.mxu0 0
    %118 = vmatprep.subr.bf16.mxu0 0
    %119 = vmatpush1.bf16.msra.mxu0 0
    %120 = vmatprep.subr.bf16.mxu0 0
    %121 = vmatpush1.bf16.msra.mxu0 0
    %122 = vmatprep.subr.bf16.mxu0 0
    %123 = vmatpush1.bf16.msra.mxu0 0
    %124 = vmatprep.subr.bf16.mxu0 0
    %125 = vmatpush1.bf16.msra.mxu0 0
    %126 = vmatprep.subr.bf16.mxu0 0
    %127 = vmatpush1.bf16.msra.mxu0 0
    %128 = vmatprep.subr.bf16.mxu0 0
    %129 = vmatpush1.bf16.msra.mxu0 0
    %130 = vmatprep.subr.bf16.mxu0 0
    %131 = vmatpush1.bf16.msra.mxu0 0
    %132 = vmatprep.subr.bf16.mxu0 0
    %133 = vmatpush1.bf16.msra.mxu0 0
    %134 = vmatprep.subr.bf16.mxu0 0
    %135 = vmatpush1.bf16.msra.mxu0 0
    %136 = vmatprep.subr.bf16.mxu0 0
    %137 = vmatpush1.bf16.msra.mxu0 0
    %138 = vmatprep.subr.bf16.mxu0 0
    %139 = vmatpush1.bf16.msra.mxu0 0
    %140 = vmatprep.mubr.bf16.mxu0 0
    %141 = vmatmul.mubr.bf16.gmra.mrb[0].mxu0 %v106
    %v142 = vpop.f32.mrb[0].mxu0
    %v143 = vadd.f32 %v85, %v142
    %v144 = vpop.f32.mrb[0].mxu0
    %v145 = vpop.f32.mrb[0].mxu0
    %v146 = vadd.f32 %v85, %v145
    %v147 = vpop.f32.mrb[0].mxu0
    %148 = vdwg.mxu0
    %v149 = vmax.f32 %v143, 0.0
    %v150 = vmax.f32 %v146, 0.0
    %v151 = vpack.c.bf16 %v150, %v149
    %v152 = vld [vmem:[%s3] sm:$0xf]
    %v153 = vld [vmem:[%s3 + $0x4] sm:$0xf]
    %v154 = vld [vmem:[%s3 + $0x8] sm:$0xf]
    %v155 = vld [vmem:[%s3 + $0xc] sm:$0xf]
    %v156 = vld [vmem:[%s3 + $0x10] sm:$0xf]
    %v157 = vld [vmem:[%s3 + $0x14] sm:$0xf]
    %v158 = vld [vmem:[%s3 + $0x18] sm:$0xf]
    %v159 = vld [vmem:[%s3 + $0x1c] sm:$0xf]
    %v160 = vld [vmem:[%s4] sm:$0x1]
    %v162 = vlaneseq
    %v163 = vshrl.u32 %v162, 7
    %v164 = vsub.s32 0, %v163
    %v165 = vrot.slane %v160, %v164
    %v175 = vunpack.c.l.b16 %v152
    %v176 = vunpack.c.l.b16 %v153
    %v177 = vunpack.c.l.b16 %v154
    %v178 = vunpack.c.l.b16 %v155
    %v179 = vunpack.c.l.b16 %v156
    %v180 = vunpack.c.l.b16 %v157
    %v181 = vunpack.c.l.b16 %v158
    %v182 = vunpack.c.l.b16 %v159
    %v183 = vpack.c.b16 %v176, %v175
    %v184 = vpack.c.b16 %v178, %v177
    %v185 = vpack.c.b16 %v180, %v179
    %v186 = vpack.c.b16 %v182, %v181
    %vm191 = vcmask 523264
    %v193 = vsel %vm191, %v151, 0
    %195 = vmatprep.subr.bf16.mxu0 0
    %196 = vmatpush1.bf16.msra.mxu0 %v183
    %197 = vmatprep.subr.bf16.mxu0 0
    %198 = vmatpush1.bf16.msra.mxu0 %v184
    %199 = vmatprep.subr.bf16.mxu0 0
    %200 = vmatpush1.bf16.msra.mxu0 %v185
    %201 = vmatprep.subr.bf16.mxu0 0
    %202 = vmatpush1.bf16.msra.mxu0 %v186
    %203 = vmatprep.subr.bf16.mxu0 0
    %204 = vmatpush1.bf16.msra.mxu0 0
    %205 = vmatprep.subr.bf16.mxu0 0
    %206 = vmatpush1.bf16.msra.mxu0 0
    %207 = vmatprep.subr.bf16.mxu0 0
    %208 = vmatpush1.bf16.msra.mxu0 0
    %209 = vmatprep.subr.bf16.mxu0 0
    %210 = vmatpush1.bf16.msra.mxu0 0
    %211 = vmatprep.subr.bf16.mxu0 0
    %212 = vmatpush1.bf16.msra.mxu0 0
    %213 = vmatprep.subr.bf16.mxu0 0
    %214 = vmatpush1.bf16.msra.mxu0 0
    %215 = vmatprep.subr.bf16.mxu0 0
    %216 = vmatpush1.bf16.msra.mxu0 0
    %217 = vmatprep.subr.bf16.mxu0 0
    %218 = vmatpush1.bf16.msra.mxu0 0
    %219 = vmatprep.subr.bf16.mxu0 0
    %220 = vmatpush1.bf16.msra.mxu0 0
    %221 = vmatprep.subr.bf16.mxu0 0
    %222 = vmatpush1.bf16.msra.mxu0 0
    %223 = vmatprep.subr.bf16.mxu0 0
    %224 = vmatpush1.bf16.msra.mxu0 0
    %225 = vmatprep.subr.bf16.mxu0 0
    %226 = vmatpush1.bf16.msra.mxu0 0
    %227 = vmatprep.mubr.bf16.mxu0 0
    %228 = vmatmul.mubr.bf16.gmra.mrb[0].mxu0 %v193
    %v229 = vpop.f32.mrb[0].mxu0
    %v230 = vadd.f32 %v165, %v229
    %v231 = vpop.f32.mrb[0].mxu0
    %v232 = vpop.f32.mrb[0].mxu0
    %v233 = vadd.f32 %v165, %v232
    %v234 = vpop.f32.mrb[0].mxu0
    %235 = vdwg.mxu0
    %v236 = vmax.f32 %v230, 0.0
    %v237 = vmax.f32 %v233, 0.0
    %v238 = vpack.c.bf16 %v237, %v236
    %v239 = vld [vmem:[#allocation4] sm:$0xf]
    %v240 = vld [vmem:[#allocation4 + $0x4] sm:$0xf]
    %v241 = vld [vmem:[#allocation4 + $0x8] sm:$0xf]
    %v242 = vld [vmem:[#allocation4 + $0xc] sm:$0xf]
    %v243 = vld [vmem:[#allocation4 + $0x10] sm:$0xf]
    %v244 = vld [vmem:[#allocation4 + $0x14] sm:$0xf]
    %v245 = vld [vmem:[#allocation4 + $0x18] sm:$0xf]
    %v246 = vld [vmem:[#allocation4 + $0x1c] sm:$0xf]
    %v247 = vld [vmem:[%s6] sm:$0x1]
    %v249 = vlaneseq
    %v250 = vshrl.u32 %v249, 7
    %v251 = vsub.s32 0, %v250
    %v252 = vrot.slane %v247, %v251
    %v262 = vunpack.c.l.b16 %v239
    %v263 = vunpack.c.l.b16 %v240
    %v264 = vunpack.c.l.b16 %v241
    %v265 = vunpack.c.l.b16 %v242
    %v266 = vunpack.c.l.b16 %v243
    %v267 = vunpack.c.l.b16 %v244
    %v268 = vunpack.c.l.b16 %v245
    %v269 = vunpack.c.l.b16 %v246
    %v270 = vpack.c.b16 %v263, %v262
    %v271 = vpack.c.b16 %v265, %v264
    %v272 = vpack.c.b16 %v267, %v266
    %v273 = vpack.c.b16 %v269, %v268
    %v279 = vsel %vm191, %v238, 0
    %281 = vmatprep.subr.bf16.mxu0 0
    %282 = vmatpush1.bf16.msra.mxu0 %v270
    %283 = vmatprep.subr.bf16.mxu0 0
    %284 = vmatpush1.bf16.msra.mxu0 %v271
    %285 = vmatprep.subr.bf16.mxu0 0
    %286 = vmatpush1.bf16.msra.mxu0 %v272
    %287 = vmatprep.subr.bf16.mxu0 0
    %288 = vmatpush1.bf16.msra.mxu0 %v273
    %289 = vmatprep.subr.bf16.mxu0 0
    %290 = vmatpush1.bf16.msra.mxu0 0
    %291 = vmatprep.subr.bf16.mxu0 0
    %292 = vmatpush1.bf16.msra.mxu0 0
    %293 = vmatprep.subr.bf16.mxu0 0
    %294 = vmatpush1.bf16.msra.mxu0 0
    %295 = vmatprep.subr.bf16.mxu0 0
    %296 = vmatpush1.bf16.msra.mxu0 0
    %297 = vmatprep.subr.bf16.mxu0 0
    %298 = vmatpush1.bf16.msra.mxu0 0
    %299 = vmatprep.subr.bf16.mxu0 0
    %300 = vmatpush1.bf16.msra.mxu0 0
    %301 = vmatprep.subr.bf16.mxu0 0
    %302 = vmatpush1.bf16.msra.mxu0 0
    %303 = vmatprep.subr.bf16.mxu0 0
    %304 = vmatpush1.bf16.msra.mxu0 0
    %305 = vmatprep.subr.bf16.mxu0 0
    %306 = vmatpush1.bf16.msra.mxu0 0
    %307 = vmatprep.subr.bf16.mxu0 0
    %308 = vmatpush1.bf16.msra.mxu0 0
    %309 = vmatprep.subr.bf16.mxu0 0
    %310 = vmatpush1.bf16.msra.mxu0 0
    %311 = vmatprep.subr.bf16.mxu0 0
    %312 = vmatpush1.bf16.msra.mxu0 0
    %313 = vmatprep.mubr.bf16.mxu0 0
    %314 = vmatmul.mubr.bf16.gmra.mrb[0].mxu0 %v279
    %v315 = vpop.f32.mrb[0].mxu0
    %v316 = vadd.f32 %v252, %v315
    %v317 = vpop.f32.mrb[0].mxu0
    %v318 = vpop.f32.mrb[0].mxu0
    %v319 = vadd.f32 %v252, %v318
    %v320 = vpop.f32.mrb[0].mxu0
    %321 = vdwg.mxu0
    %v322 = vmax.f32 %v316, 0.0
    %v323 = vmax.f32 %v319, 0.0
    %v324 = vpack.c.bf16 %v323, %v322
    %v325 = vld [vmem:[#allocation6] sm:$0xf]
    %v326 = vld [vmem:[#allocation6 + $0x4] sm:$0xf]
    %v327 = vld [vmem:[#allocation6 + $0x8] sm:$0xf]
    %v328 = vld [vmem:[#allocation6 + $0xc] sm:$0xf]
    %v329 = vld [vmem:[#allocation6 + $0x10] sm:$0xf]
    %v330 = vld [vmem:[#allocation6 + $0x14] sm:$0xf]
    %v331 = vld [vmem:[#allocation6 + $0x18] sm:$0xf]
    %v332 = vld [vmem:[#allocation6 + $0x1c] sm:$0xf]
    %v333 = vld [vmem:[%s8] sm:$0x1]
    %v335 = vlaneseq
    %v336 = vshrl.u32 %v335, 7
    %v337 = vsub.s32 0, %v336
    %v338 = vrot.slane %v333, %v337
    %v348 = vunpack.c.l.b16 %v325
    %v349 = vunpack.c.l.b16 %v326
    %v350 = vunpack.c.l.b16 %v327
    %v351 = vunpack.c.l.b16 %v328
    %v352 = vunpack.c.l.b16 %v329
    %v353 = vunpack.c.l.b16 %v330
    %v354 = vunpack.c.l.b16 %v331
    %v355 = vunpack.c.l.b16 %v332
    %v356 = vpack.c.b16 %v349, %v348
    %v357 = vpack.c.b16 %v351, %v350
    %v358 = vpack.c.b16 %v353, %v352
    %v359 = vpack.c.b16 %v355, %v354
    %v365 = vsel %vm191, %v324, 0
    %367 = vmatprep.subr.bf16.mxu0 0
    %368 = vmatpush1.bf16.msra.mxu0 %v356
    %369 = vmatprep.subr.bf16.mxu0 0
    %370 = vmatpush1.bf16.msra.mxu0 %v357
    %371 = vmatprep.subr.bf16.mxu0 0
    %372 = vmatpush1.bf16.msra.mxu0 %v358
    %373 = vmatprep.subr.bf16.mxu0 0
    %374 = vmatpush1.bf16.msra.mxu0 %v359
    %375 = vmatprep.subr.bf16.mxu0 0
    %376 = vmatpush1.bf16.msra.mxu0 0
    %377 = vmatprep.subr.bf16.mxu0 0
    %378 = vmatpush1.bf16.msra.mxu0 0
    %379 = vmatprep.subr.bf16.mxu0 0
    %380 = vmatpush1.bf16.msra.mxu0 0
    %381 = vmatprep.subr.bf16.mxu0 0
    %382 = vmatpush1.bf16.msra.mxu0 0
    %383 = vmatprep.subr.bf16.mxu0 0
    %384 = vmatpush1.bf16.msra.mxu0 0
    %385 = vmatprep.subr.bf16.mxu0 0
    %386 = vmatpush1.bf16.msra.mxu0 0
    %387 = vmatprep.subr.bf16.mxu0 0
    %388 = vmatpush1.bf16.msra.mxu0 0
    %389 = vmatprep.subr.bf16.mxu0 0
    %390 = vmatpush1.bf16.msra.mxu0 0
    %391 = vmatprep.subr.bf16.mxu0 0
    %392 = vmatpush1.bf16.msra.mxu0 0
    %393 = vmatprep.subr.bf16.mxu0 0
    %394 = vmatpush1.bf16.msra.mxu0 0
    %395 = vmatprep.subr.bf16.mxu0 0
    %396 = vmatpush1.bf16.msra.mxu0 0
    %397 = vmatprep.subr.bf16.mxu0 0
    %398 = vmatpush1.bf16.msra.mxu0 0
    %399 = vmatprep.mubr.bf16.mxu0 0
    %400 = vmatmul.mubr.bf16.gmra.mrb[0].mxu0 %v365
    %v401 = vpop.f32.mrb[0].mxu0
    %v402 = vadd.f32 %v338, %v401
    %v403 = vpop.f32.mrb[0].mxu0
    %v404 = vpop.f32.mrb[0].mxu0
    %v405 = vadd.f32 %v338, %v404
    %v406 = vpop.f32.mrb[0].mxu0
    %407 = vdwg.mxu0
    %408 = vst [vmem:[%s9] sm:$0xff] %v402
    %409 = vst [vmem:[%s9 + $0x8] sm:$0xff] %v405
    // Predicated region
    $region50: #{micro_seg_head_forward.1} parent=1 // pred_check
      _
    $region51: #{micro_seg_head_forward.1} parent=1 // pred_check_branch
      %411 = sbr.rel (0) target = $region53
    $region52: #{micro_seg_head_forward.1} parent=1 // pred_region
      _
    $region53: #{micro_seg_head_forward.1} parent=1 // pred_fallthru
      _
    // Predicated region
    $region54: #{micro_seg_head_forward.1} parent=1 // pred_check
      _
    $region55: #{micro_seg_head_forward.1} parent=1 // pred_check_branch
      %413 = sbr.rel (0) target = $region57
    $region56: #{micro_seg_head_forward.1} parent=1 // pred_region
      _
    $region57: #{micro_seg_head_forward.1} parent=1 // pred_fallthru
      _
    %414 = vsyncpa [#allocation3], 1
    %415 = vsyncpa [#allocation5], 1

</llo_original>
